<compile_context>
chip_gen: v7x
topology: tpu7x:2x2x1
jax: 0.10.0
libtpu: 0.0.40
codegen_flags: <defaults>
</compile_context>

<pallas_src>
import functools

import jax
import jax.numpy as jnp
from jax.experimental import pallas as pl
from jax.experimental.pallas import tpu as pltpu


GROUP = 8  # ids handled per grid step -> one (8, 128) f32 output tile per table


def _lightgcn_kernel(uids_ref, iids_ref, *refs, p, training, group):
    """Fused embedding gather + inverted dropout for user and item ids.

    refs layout:
      refs[0:group]        -> gathered user rows, each (1, 1, D)
      refs[group:2*group]  -> gathered item rows, each (1, 1, D)
      refs[2*group + 0]    -> user dropout bits, (group, D) uint32
      refs[2*group + 1]    -> item dropout bits, (group, D) uint32
      refs[2*group + 2]    -> user output, (group, D)
      refs[2*group + 3]    -> item output, (group, D)
    """
    del uids_ref, iids_ref  # only consumed by the index_maps (scalar prefetch)
    u_row_refs = refs[:group]
    i_row_refs = refs[group:2 * group]
    ubits_ref = refs[2 * group + 0]
    ibits_ref = refs[2 * group + 1]
    uout_ref = refs[2 * group + 2]
    iout_ref = refs[2 * group + 3]

    # Assemble the per-row gathered blocks into one (group, D) tile each.
    u_rows = jnp.concatenate([r[0] for r in u_row_refs], axis=0)
    i_rows = jnp.concatenate([r[0] for r in i_row_refs], axis=0)

    if training and p > 0.0:
        # Inverted dropout: keep with prob (1-p), scale kept values by 1/(1-p).
        # Integer threshold compare on the raw uint32 bits (no float convert).
        threshold = jnp.uint32(int(round(p * (2 ** 32))))
        scale = jnp.float32(1.0 / (1.0 - p))
        uout_ref[...] = jnp.where(ubits_ref[...] >= threshold,
                                  u_rows * scale, 0.0).astype(uout_ref.dtype)
        iout_ref[...] = jnp.where(ibits_ref[...] >= threshold,
                                  i_rows * scale, 0.0).astype(iout_ref.dtype)
    else:
        uout_ref[...] = u_rows.astype(uout_ref.dtype)
        iout_ref[...] = i_rows.astype(iout_ref.dtype)


def lightgcn_forward(user_ids, item_ids, user_table, item_table, dropout_key,
                     *, p=0.2, training=True):
    """Equivalent of LightGCN.forward(user, item) -> (user_emb, item_emb)."""
    assert user_ids.shape == item_ids.shape, "user/item id batches must match"
    batch = user_ids.shape[0]
    dim = user_table.shape[1]
    assert item_table.shape[1] == dim

    num_groups = pl.cdiv(batch, GROUP)
    batch_pad = num_groups * GROUP

    uids = jnp.pad(user_ids.astype(jnp.int32), (0, batch_pad - batch))
    iids = jnp.pad(item_ids.astype(jnp.int32), (0, batch_pad - batch))
    # TODO(synk): no in-kernel bounds check on ids (matches nn.Embedding's
    # undefined behaviour for out-of-range indices); validate ids upstream.

    ku, ki = jax.random.split(dropout_key)
    ubits = jax.random.bits(ku, (batch_pad, dim), dtype=jnp.uint32)
    ibits = jax.random.bits(ki, (batch_pad, dim), dtype=jnp.uint32)

    # 3-D views so each gathered row is a (1, 1, D) block whose trailing two
    # dims equal the full array's trailing dims (TPU tiling constraint).
    u_tab3 = user_table.reshape(user_table.shape[0], 1, dim)
    i_tab3 = item_table.reshape(item_table.shape[0], 1, dim)

    def _u_row_spec(r):
        return pl.BlockSpec(
            (1, 1, dim),
            lambda g, uids_ref, iids_ref, r=r: (uids_ref[g * GROUP + r], 0, 0))

    def _i_row_spec(r):
        return pl.BlockSpec(
            (1, 1, dim),
            lambda g, uids_ref, iids_ref, r=r: (iids_ref[g * GROUP + r], 0, 0))

    tile_spec = pl.BlockSpec((GROUP, dim), lambda g, uids_ref, iids_ref: (g, 0))

    kernel = functools.partial(_lightgcn_kernel, p=p, training=training,
                               group=GROUP)

    uout, iout = pl.pallas_call(
        kernel,
        out_shape=(jax.ShapeDtypeStruct((batch_pad, dim), user_table.dtype),
                   jax.ShapeDtypeStruct((batch_pad, dim), item_table.dtype)),
        grid_spec=pltpu.PrefetchScalarGridSpec(
            num_scalar_prefetch=2,
            grid=(num_groups,),
            in_specs=([_u_row_spec(r) for r in range(GROUP)]
                      + [_i_row_spec(r) for r in range(GROUP)]
                      + [tile_spec, tile_spec]),
            out_specs=(tile_spec, tile_spec),
        ),
        compiler_params=pltpu.CompilerParams(
            dimension_semantics=("parallel",)),
    )(uids, iids, *([u_tab3] * GROUP), *([i_tab3] * GROUP), ubits, ibits)

    return uout[:batch], iout[:batch]


if __name__ == "__main__":
    num_users, num_items, embedding_dim = 64, 96, 128
    batch = 8

    key = jax.random.PRNGKey(0)
    k_u, k_i, k_uid, k_iid, k_drop = jax.random.split(key, 5)

    # Effective init from reset_parameters(): N(0, 0.01^2).
    user_table = (0.01 * jax.random.normal(
        k_u, (num_users, embedding_dim))).astype(jnp.float32)
    item_table = (0.01 * jax.random.normal(
        k_i, (num_items, embedding_dim))).astype(jnp.float32)

    user_ids = jax.random.randint(k_uid, (batch,), 0, num_users, dtype=jnp.int32)
    item_ids = jax.random.randint(k_iid, (batch,), 0, num_items, dtype=jnp.int32)

    # Training-mode forward (with dropout).
    ue, ie = lightgcn_forward(user_ids, item_ids, user_table, item_table,
                              k_drop, p=0.2, training=True)
    jax.block_until_ready((ue, ie))
    assert ue.shape == (batch, embedding_dim) and ue.dtype == jnp.float32
    assert ie.shape == (batch, embedding_dim) and ie.dtype == jnp.float32

    # Gather path (eval mode, no dropout) must match pure-JAX reference exactly.
    ue_eval, ie_eval = lightgcn_forward(user_ids, item_ids, user_table,
                                        item_table, k_drop, p=0.2,
                                        training=False)
    assert jnp.allclose(ue_eval, user_table[user_ids])
    assert jnp.allclose(ie_eval, item_table[item_ids])

    # Dropout path: each element is either 0 or the gathered value * 1/(1-p).
    scale = 1.0 / (1.0 - 0.2)
    keep_u = ue != 0.0
    keep_i = ie != 0.0
    assert jnp.allclose(ue, jnp.where(keep_u, user_table[user_ids] * scale, 0.0),
                        atol=1e-6)
    assert jnp.allclose(ie, jnp.where(keep_i, item_table[item_ids] * scale, 0.0),
                        atol=1e-6)
    keep_rate = 0.5 * (float(jnp.mean(keep_u.astype(jnp.float32)))
                       + float(jnp.mean(keep_i.astype(jnp.float32))))
    assert 0.6 < keep_rate < 0.95  # expected ~0.8

    print("KERNEL_OK")
</pallas_src>

<mosaic_0001>
module attributes {stable_mosaic.version = 11 : i64} {
  func.func @_lightgcn_kernel(%arg0: i32, %arg1: memref<8xi32, #tpu.memory_space<smem>>, %arg2: memref<8xi32, #tpu.memory_space<smem>>, %arg3: memref<1x1x128xf32, #tpu.memory_space<vmem>>, %arg4: memref<1x1x128xf32, #tpu.memory_space<vmem>>, %arg5: memref<1x1x128xf32, #tpu.memory_space<vmem>>, %arg6: memref<1x1x128xf32, #tpu.memory_space<vmem>>, %arg7: memref<1x1x128xf32, #tpu.memory_space<vmem>>, %arg8: memref<1x1x128xf32, #tpu.memory_space<vmem>>, %arg9: memref<1x1x128xf32, #tpu.memory_space<vmem>>, %arg10: memref<1x1x128xf32, #tpu.memory_space<vmem>>, %arg11: memref<1x1x128xf32, #tpu.memory_space<vmem>>, %arg12: memref<1x1x128xf32, #tpu.memory_space<vmem>>, %arg13: memref<1x1x128xf32, #tpu.memory_space<vmem>>, %arg14: memref<1x1x128xf32, #tpu.memory_space<vmem>>, %arg15: memref<1x1x128xf32, #tpu.memory_space<vmem>>, %arg16: memref<1x1x128xf32, #tpu.memory_space<vmem>>, %arg17: memref<1x1x128xf32, #tpu.memory_space<vmem>>, %arg18: memref<1x1x128xf32, #tpu.memory_space<vmem>>, %arg19: memref<8x128xi32, #tpu.memory_space<vmem>>, %arg20: memref<8x128xi32, #tpu.memory_space<vmem>>, %arg21: memref<8x128xf32, #tpu.memory_space<vmem>>, %arg22: memref<8x128xf32, #tpu.memory_space<vmem>>) attributes {dimension_semantics = [#tpu.dimension_semantics<parallel>], iteration_bounds = array<i64: 1>, scalar_prefetch = 2 : i64, scratch_operands = 0 : i64, tpu.core_type = #tpu.core_type<tc>, window_params = [{transform_indices = @transform_0, window_bounds = array<i64: 1, 1, 128>}, {transform_indices = @transform_1, window_bounds = array<i64: 1, 1, 128>}, {transform_indices = @transform_2, window_bounds = array<i64: 1, 1, 128>}, {transform_indices = @transform_3, window_bounds = array<i64: 1, 1, 128>}, {transform_indices = @transform_4, window_bounds = array<i64: 1, 1, 128>}, {transform_indices = @transform_5, window_bounds = array<i64: 1, 1, 128>}, {transform_indices = @transform_6, window_bounds = array<i64: 1, 1, 128>}, {transform_indices = @transform_7, window_bounds = array<i64: 1, 1, 128>}, {transform_indices = @transform_8, window_bounds = array<i64: 1, 1, 128>}, {transform_indices = @transform_9, window_bounds = array<i64: 1, 1, 128>}, {transform_indices = @transform_10, window_bounds = array<i64: 1, 1, 128>}, {transform_indices = @transform_11, window_bounds = array<i64: 1, 1, 128>}, {transform_indices = @transform_12, window_bounds = array<i64: 1, 1, 128>}, {transform_indices = @transform_13, window_bounds = array<i64: 1, 1, 128>}, {transform_indices = @transform_14, window_bounds = array<i64: 1, 1, 128>}, {transform_indices = @transform_15, window_bounds = array<i64: 1, 1, 128>}, {transform_indices = @transform_16, window_bounds = array<i64: 8, 128>}, {transform_indices = @transform_17, window_bounds = array<i64: 8, 128>}, {transform_indices = @transform_18, window_bounds = array<i64: 8, 128>}, {transform_indices = @transform_19, window_bounds = array<i64: 8, 128>}]} {
    %c0 = arith.constant 0 : index
    %c0_0 = arith.constant 0 : index
    %c0_1 = arith.constant 0 : index
    %0 = vector.load %arg3[%c0, %c0_0, %c0_1] : memref<1x1x128xf32, #tpu.memory_space<vmem>>, vector<1x1x128xf32>
    %1 = vector.shape_cast %0 : vector<1x1x128xf32> to vector<1x128xf32>
    %c0_2 = arith.constant 0 : index
    %c0_3 = arith.constant 0 : index
    %c0_4 = arith.constant 0 : index
    %2 = vector.load %arg4[%c0_2, %c0_3, %c0_4] : memref<1x1x128xf32, #tpu.memory_space<vmem>>, vector<1x1x128xf32>
    %3 = vector.shape_cast %2 : vector<1x1x128xf32> to vector<1x128xf32>
    %c0_5 = arith.constant 0 : index
    %c0_6 = arith.constant 0 : index
    %c0_7 = arith.constant 0 : index
    %4 = vector.load %arg5[%c0_5, %c0_6, %c0_7] : memref<1x1x128xf32, #tpu.memory_space<vmem>>, vector<1x1x128xf32>
    %5 = vector.shape_cast %4 : vector<1x1x128xf32> to vector<1x128xf32>
    %c0_8 = arith.constant 0 : index
    %c0_9 = arith.constant 0 : index
    %c0_10 = arith.constant 0 : index
    %6 = vector.load %arg6[%c0_8, %c0_9, %c0_10] : memref<1x1x128xf32, #tpu.memory_space<vmem>>, vector<1x1x128xf32>
    %7 = vector.shape_cast %6 : vector<1x1x128xf32> to vector<1x128xf32>
    %c0_11 = arith.constant 0 : index
    %c0_12 = arith.constant 0 : index
    %c0_13 = arith.constant 0 : index
    %8 = vector.load %arg7[%c0_11, %c0_12, %c0_13] : memref<1x1x128xf32, #tpu.memory_space<vmem>>, vector<1x1x128xf32>
    %9 = vector.shape_cast %8 : vector<1x1x128xf32> to vector<1x128xf32>
    %c0_14 = arith.constant 0 : index
    %c0_15 = arith.constant 0 : index
    %c0_16 = arith.constant 0 : index
    %10 = vector.load %arg8[%c0_14, %c0_15, %c0_16] : memref<1x1x128xf32, #tpu.memory_space<vmem>>, vector<1x1x128xf32>
    %11 = vector.shape_cast %10 : vector<1x1x128xf32> to vector<1x128xf32>
    %c0_17 = arith.constant 0 : index
    %c0_18 = arith.constant 0 : index
    %c0_19 = arith.constant 0 : index
    %12 = vector.load %arg9[%c0_17, %c0_18, %c0_19] : memref<1x1x128xf32, #tpu.memory_space<vmem>>, vector<1x1x128xf32>
    %13 = vector.shape_cast %12 : vector<1x1x128xf32> to vector<1x128xf32>
    %c0_20 = arith.constant 0 : index
    %c0_21 = arith.constant 0 : index
    %c0_22 = arith.constant 0 : index
    %14 = vector.load %arg10[%c0_20, %c0_21, %c0_22] : memref<1x1x128xf32, #tpu.memory_space<vmem>>, vector<1x1x128xf32>
    %15 = vector.shape_cast %14 : vector<1x1x128xf32> to vector<1x128xf32>
    %16 = tpu.concatenate %1, %3, %5, %7, %9, %11, %13, %15 in 0 : vector<1x128xf32>, vector<1x128xf32>, vector<1x128xf32>, vector<1x128xf32>, vector<1x128xf32>, vector<1x128xf32>, vector<1x128xf32>, vector<1x128xf32> -> vector<8x128xf32>
    %c0_23 = arith.constant 0 : index
    %c0_24 = arith.constant 0 : index
    %c0_25 = arith.constant 0 : index
    %17 = vector.load %arg11[%c0_23, %c0_24, %c0_25] : memref<1x1x128xf32, #tpu.memory_space<vmem>>, vector<1x1x128xf32>
    %18 = vector.shape_cast %17 : vector<1x1x128xf32> to vector<1x128xf32>
    %c0_26 = arith.constant 0 : index
    %c0_27 = arith.constant 0 : index
    %c0_28 = arith.constant 0 : index
    %19 = vector.load %arg12[%c0_26, %c0_27, %c0_28] : memref<1x1x128xf32, #tpu.memory_space<vmem>>, vector<1x1x128xf32>
    %20 = vector.shape_cast %19 : vector<1x1x128xf32> to vector<1x128xf32>
    %c0_29 = arith.constant 0 : index
    %c0_30 = arith.constant 0 : index
    %c0_31 = arith.constant 0 : index
    %21 = vector.load %arg13[%c0_29, %c0_30, %c0_31] : memref<1x1x128xf32, #tpu.memory_space<vmem>>, vector<1x1x128xf32>
    %22 = vector.shape_cast %21 : vector<1x1x128xf32> to vector<1x128xf32>
    %c0_32 = arith.constant 0 : index
    %c0_33 = arith.constant 0 : index
    %c0_34 = arith.constant 0 : index
    %23 = vector.load %arg14[%c0_32, %c0_33, %c0_34] : memref<1x1x128xf32, #tpu.memory_space<vmem>>, vector<1x1x128xf32>
    %24 = vector.shape_cast %23 : vector<1x1x128xf32> to vector<1x128xf32>
    %c0_35 = arith.constant 0 : index
    %c0_36 = arith.constant 0 : index
    %c0_37 = arith.constant 0 : index
    %25 = vector.load %arg15[%c0_35, %c0_36, %c0_37] : memref<1x1x128xf32, #tpu.memory_space<vmem>>, vector<1x1x128xf32>
    %26 = vector.shape_cast %25 : vector<1x1x128xf32> to vector<1x128xf32>
    %c0_38 = arith.constant 0 : index
    %c0_39 = arith.constant 0 : index
    %c0_40 = arith.constant 0 : index
    %27 = vector.load %arg16[%c0_38, %c0_39, %c0_40] : memref<1x1x128xf32, #tpu.memory_space<vmem>>, vector<1x1x128xf32>
    %28 = vector.shape_cast %27 : vector<1x1x128xf32> to vector<1x128xf32>
    %c0_41 = arith.constant 0 : index
    %c0_42 = arith.constant 0 : index
    %c0_43 = arith.constant 0 : index
    %29 = vector.load %arg17[%c0_41, %c0_42, %c0_43] : memref<1x1x128xf32, #tpu.memory_space<vmem>>, vector<1x1x128xf32>
    %30 = vector.shape_cast %29 : vector<1x1x128xf32> to vector<1x128xf32>
    %c0_44 = arith.constant 0 : index
    %c0_45 = arith.constant 0 : index
    %c0_46 = arith.constant 0 : index
    %31 = vector.load %arg18[%c0_44, %c0_45, %c0_46] : memref<1x1x128xf32, #tpu.memory_space<vmem>>, vector<1x1x128xf32>
    %32 = vector.shape_cast %31 : vector<1x1x128xf32> to vector<1x128xf32>
    %33 = tpu.concatenate %18, %20, %22, %24, %26, %28, %30, %32 in 0 : vector<1x128xf32>, vector<1x128xf32>, vector<1x128xf32>, vector<1x128xf32>, vector<1x128xf32>, vector<1x128xf32>, vector<1x128xf32>, vector<1x128xf32> -> vector<8x128xf32>
    %c0_47 = arith.constant 0 : index
    %c0_48 = arith.constant 0 : index
    %34 = vector.load %arg19[%c0_47, %c0_48] : memref<8x128xi32, #tpu.memory_space<vmem>>, vector<8x128xi32>
    %c858993459_i32 = arith.constant 858993459 : i32
    %35 = vector.broadcast %c858993459_i32 : i32 to vector<8x128xi32>
    %36 = arith.cmpi uge, %34, %35 : vector<8x128xi32>
    %cst = arith.constant 1.250000e+00 : f32
    %37 = vector.broadcast %cst : f32 to vector<8x128xf32>
    %38 = arith.mulf %16, %37 : vector<8x128xf32>
    %cst_49 = arith.constant 0.000000e+00 : f32
    %39 = vector.broadcast %cst_49 : f32 to vector<8x128xf32>
    %40 = arith.select %36, %38, %39 : vector<8x128xi1>, vector<8x128xf32>
    %c0_50 = arith.constant 0 : index
    %c0_51 = arith.constant 0 : index
    %41 = vector.load %arg21[%c0_50, %c0_51] : memref<8x128xf32, #tpu.memory_space<vmem>>, vector<8x128xf32>
    tpu.vector_store %arg21[%c0_50, %c0_51], %40 {strides = array<i32>} : memref<8x128xf32, #tpu.memory_space<vmem>>, vector<8x128xf32>,
    %c0_52 = arith.constant 0 : index
    %c0_53 = arith.constant 0 : index
    %42 = vector.load %arg20[%c0_52, %c0_53] : memref<8x128xi32, #tpu.memory_space<vmem>>, vector<8x128xi32>
    %c858993459_i32_54 = arith.constant 858993459 : i32
    %43 = vector.broadcast %c858993459_i32_54 : i32 to vector<8x128xi32>
    %44 = arith.cmpi uge, %42, %43 : vector<8x128xi32>
    %cst_55 = arith.constant 1.250000e+00 : f32
    %45 = vector.broadcast %cst_55 : f32 to vector<8x128xf32>
    %46 = arith.mulf %33, %45 : vector<8x128xf32>
    %cst_56 = arith.constant 0.000000e+00 : f32
    %47 = vector.broadcast %cst_56 : f32 to vector<8x128xf32>
    %48 = arith.select %44, %46, %47 : vector<8x128xi1>, vector<8x128xf32>
    %c0_57 = arith.constant 0 : index
    %c0_58 = arith.constant 0 : index
    %49 = vector.load %arg22[%c0_57, %c0_58] : memref<8x128xf32, #tpu.memory_space<vmem>>, vector<8x128xf32>
    tpu.vector_store %arg22[%c0_57, %c0_58], %48 {strides = array<i32>} : memref<8x128xf32, #tpu.memory_space<vmem>>, vector<8x128xf32>,
    return
  }
  func.func @transform_0(%arg0: i32, %arg1: memref<8xi32, #tpu.memory_space<smem>>, %arg2: memref<8xi32, #tpu.memory_space<smem>>) -> (i32, i32, i32) {
    %c8_i32 = arith.constant 8 : i32
    %0 = arith.muli %arg0, %c8_i32 : i32
    %c0_i32 = arith.constant 0 : i32
    %1 = arith.addi %0, %c0_i32 : i32
    %2 = arith.index_cast %1 : i32 to index
    %3 = memref.load %arg1[%2] : memref<8xi32, #tpu.memory_space<smem>>
    %c0_i32_0 = arith.constant 0 : i32
    %c0_i32_1 = arith.constant 0 : i32
    %c0_i32_2 = arith.constant 0 : i32
    return %3, %c0_i32_0, %c0_i32_1 : i32, i32, i32
  }
  func.func @transform_1(%arg0: i32, %arg1: memref<8xi32, #tpu.memory_space<smem>>, %arg2: memref<8xi32, #tpu.memory_space<smem>>) -> (i32, i32, i32) {
    %c8_i32 = arith.constant 8 : i32
    %0 = arith.muli %arg0, %c8_i32 : i32
    %c1_i32 = arith.constant 1 : i32
    %1 = arith.addi %0, %c1_i32 : i32
    %2 = arith.index_cast %1 : i32 to index
    %3 = memref.load %arg1[%2] : memref<8xi32, #tpu.memory_space<smem>>
    %c0_i32 = arith.constant 0 : i32
    %c0_i32_0 = arith.constant 0 : i32
    %c0_i32_1 = arith.constant 0 : i32
    return %3, %c0_i32, %c0_i32_0 : i32, i32, i32
  }
  func.func @transform_2(%arg0: i32, %arg1: memref<8xi32, #tpu.memory_space<smem>>, %arg2: memref<8xi32, #tpu.memory_space<smem>>) -> (i32, i32, i32) {
    %c8_i32 = arith.constant 8 : i32
    %0 = arith.muli %arg0, %c8_i32 : i32
    %c2_i32 = arith.constant 2 : i32
    %1 = arith.addi %0, %c2_i32 : i32
    %2 = arith.index_cast %1 : i32 to index
    %3 = memref.load %arg1[%2] : memref<8xi32, #tpu.memory_space<smem>>
    %c0_i32 = arith.constant 0 : i32
    %c0_i32_0 = arith.constant 0 : i32
    %c0_i32_1 = arith.constant 0 : i32
    return %3, %c0_i32, %c0_i32_0 : i32, i32, i32
  }
  func.func @transform_3(%arg0: i32, %arg1: memref<8xi32, #tpu.memory_space<smem>>, %arg2: memref<8xi32, #tpu.memory_space<smem>>) -> (i32, i32, i32) {
    %c8_i32 = arith.constant 8 : i32
    %0 = arith.muli %arg0, %c8_i32 : i32
    %c3_i32 = arith.constant 3 : i32
    %1 = arith.addi %0, %c3_i32 : i32
    %2 = arith.index_cast %1 : i32 to index
    %3 = memref.load %arg1[%2] : memref<8xi32, #tpu.memory_space<smem>>
    %c0_i32 = arith.constant 0 : i32
    %c0_i32_0 = arith.constant 0 : i32
    %c0_i32_1 = arith.constant 0 : i32
    return %3, %c0_i32, %c0_i32_0 : i32, i32, i32
  }
  func.func @transform_4(%arg0: i32, %arg1: memref<8xi32, #tpu.memory_space<smem>>, %arg2: memref<8xi32, #tpu.memory_space<smem>>) -> (i32, i32, i32) {
    %c8_i32 = arith.constant 8 : i32
    %0 = arith.muli %arg0, %c8_i32 : i32
    %c4_i32 = arith.constant 4 : i32
    %1 = arith.addi %0, %c4_i32 : i32
    %2 = arith.index_cast %1 : i32 to index
    %3 = memref.load %arg1[%2] : memref<8xi32, #tpu.memory_space<smem>>
    %c0_i32 = arith.constant 0 : i32
    %c0_i32_0 = arith.constant 0 : i32
    %c0_i32_1 = arith.constant 0 : i32
    return %3, %c0_i32, %c0_i32_0 : i32, i32, i32
  }
  func.func @transform_5(%arg0: i32, %arg1: memref<8xi32, #tpu.memory_space<smem>>, %arg2: memref<8xi32, #tpu.memory_space<smem>>) -> (i32, i32, i32) {
    %c8_i32 = arith.constant 8 : i32
    %0 = arith.muli %arg0, %c8_i32 : i32
    %c5_i32 = arith.constant 5 : i32
    %1 = arith.addi %0, %c5_i32 : i32
    %2 = arith.index_cast %1 : i32 to index
    %3 = memref.load %arg1[%2] : memref<8xi32, #tpu.memory_space<smem>>
    %c0_i32 = arith.constant 0 : i32
    %c0_i32_0 = arith.constant 0 : i32
    %c0_i32_1 = arith.constant 0 : i32
    return %3, %c0_i32, %c0_i32_0 : i32, i32, i32
  }
  func.func @transform_6(%arg0: i32, %arg1: memref<8xi32, #tpu.memory_space<smem>>, %arg2: memref<8xi32, #tpu.memory_space<smem>>) -> (i32, i32, i32) {
    %c8_i32 = arith.constant 8 : i32
    %0 = arith.muli %arg0, %c8_i32 : i32
    %c6_i32 = arith.constant 6 : i32
    %1 = arith.addi %0, %c6_i32 : i32
    %2 = arith.index_cast %1 : i32 to index
    %3 = memref.load %arg1[%2] : memref<8xi32, #tpu.memory_space<smem>>
    %c0_i32 = arith.constant 0 : i32
    %c0_i32_0 = arith.constant 0 : i32
    %c0_i32_1 = arith.constant 0 : i32
    return %3, %c0_i32, %c0_i32_0 : i32, i32, i32
  }
  func.func @transform_7(%arg0: i32, %arg1: memref<8xi32, #tpu.memory_space<smem>>, %arg2: memref<8xi32, #tpu.memory_space<smem>>) -> (i32, i32, i32) {
    %c8_i32 = arith.constant 8 : i32
    %0 = arith.muli %arg0, %c8_i32 : i32
    %c7_i32 = arith.constant 7 : i32
    %1 = arith.addi %0, %c7_i32 : i32
    %2 = arith.index_cast %1 : i32 to index
    %3 = memref.load %arg1[%2] : memref<8xi32, #tpu.memory_space<smem>>
    %c0_i32 = arith.constant 0 : i32
    %c0_i32_0 = arith.constant 0 : i32
    %c0_i32_1 = arith.constant 0 : i32
    return %3, %c0_i32, %c0_i32_0 : i32, i32, i32
  }
  func.func @transform_8(%arg0: i32, %arg1: memref<8xi32, #tpu.memory_space<smem>>, %arg2: memref<8xi32, #tpu.memory_space<smem>>) -> (i32, i32, i32) {
    %c8_i32 = arith.constant 8 : i32
    %0 = arith.muli %arg0, %c8_i32 : i32
    %c0_i32 = arith.constant 0 : i32
    %1 = arith.addi %0, %c0_i32 : i32
    %2 = arith.index_cast %1 : i32 to index
    %3 = memref.load %arg2[%2] : memref<8xi32, #tpu.memory_space<smem>>
    %c0_i32_0 = arith.constant 0 : i32
    %c0_i32_1 = arith.constant 0 : i32
    %c0_i32_2 = arith.constant 0 : i32
    return %3, %c0_i32_0, %c0_i32_1 : i32, i32, i32
  }
  func.func @transform_9(%arg0: i32, %arg1: memref<8xi32, #tpu.memory_space<smem>>, %arg2: memref<8xi32, #tpu.memory_space<smem>>) -> (i32, i32, i32) {
    %c8_i32 = arith.constant 8 : i32
    %0 = arith.muli %arg0, %c8_i32 : i32
    %c1_i32 = arith.constant 1 : i32
    %1 = arith.addi %0, %c1_i32 : i32
    %2 = arith.index_cast %1 : i32 to index
    %3 = memref.load %arg2[%2] : memref<8xi32, #tpu.memory_space<smem>>
    %c0_i32 = arith.constant 0 : i32
    %c0_i32_0 = arith.constant 0 : i32
    %c0_i32_1 = arith.constant 0 : i32
    return %3, %c0_i32, %c0_i32_0 : i32, i32, i32
  }
  func.func @transform_10(%arg0: i32, %arg1: memref<8xi32, #tpu.memory_space<smem>>, %arg2: memref<8xi32, #tpu.memory_space<smem>>) -> (i32, i32, i32) {
    %c8_i32 = arith.constant 8 : i32
    %0 = arith.muli %arg0, %c8_i32 : i32
    %c2_i32 = arith.constant 2 : i32
    %1 = arith.addi %0, %c2_i32 : i32
    %2 = arith.index_cast %1 : i32 to index
    %3 = memref.load %arg2[%2] : memref<8xi32, #tpu.memory_space<smem>>
    %c0_i32 = arith.constant 0 : i32
    %c0_i32_0 = arith.constant 0 : i32
    %c0_i32_1 = arith.constant 0 : i32
    return %3, %c0_i32, %c0_i32_0 : i32, i32, i32
  }
  func.func @transform_11(%arg0: i32, %arg1: memref<8xi32, #tpu.memory_space<smem>>, %arg2: memref<8xi32, #tpu.memory_space<smem>>) -> (i32, i32, i32) {
    %c8_i32 = arith.constant 8 : i32
    %0 = arith.muli %arg0, %c8_i32 : i32
    %c3_i32 = arith.constant 3 : i32
    %1 = arith.addi %0, %c3_i32 : i32
    %2 = arith.index_cast %1 : i32 to index
    %3 = memref.load %arg2[%2] : memref<8xi32, #tpu.memory_space<smem>>
    %c0_i32 = arith.constant 0 : i32
    %c0_i32_0 = arith.constant 0 : i32
    %c0_i32_1 = arith.constant 0 : i32
    return %3, %c0_i32, %c0_i32_0 : i32, i32, i32
  }
  func.func @transform_12(%arg0: i32, %arg1: memref<8xi32, #tpu.memory_space<smem>>, %arg2: memref<8xi32, #tpu.memory_space<smem>>) -> (i32, i32, i32) {
    %c8_i32 = arith.constant 8 : i32
    %0 = arith.muli %arg0, %c8_i32 : i32
    %c4_i32 = arith.constant 4 : i32
    %1 = arith.addi %0, %c4_i32 : i32
    %2 = arith.index_cast %1 : i32 to index
    %3 = memref.load %arg2[%2] : memref<8xi32, #tpu.memory_space<smem>>
    %c0_i32 = arith.constant 0 : i32
    %c0_i32_0 = arith.constant 0 : i32
    %c0_i32_1 = arith.constant 0 : i32
    return %3, %c0_i32, %c0_i32_0 : i32, i32, i32
  }
  func.func @transform_13(%arg0: i32, %arg1: memref<8xi32, #tpu.memory_space<smem>>, %arg2: memref<8xi32, #tpu.memory_space<smem>>) -> (i32, i32, i32) {
    %c8_i32 = arith.constant 8 : i32
    %0 = arith.muli %arg0, %c8_i32 : i32
    %c5_i32 = arith.constant 5 : i32
    %1 = arith.addi %0, %c5_i32 : i32
    %2 = arith.index_cast %1 : i32 to index
    %3 = memref.load %arg2[%2] : memref<8xi32, #tpu.memory_space<smem>>
    %c0_i32 = arith.constant 0 : i32
    %c0_i32_0 = arith.constant 0 : i32
    %c0_i32_1 = arith.constant 0 : i32
    return %3, %c0_i32, %c0_i32_0 : i32, i32, i32
  }
  func.func @transform_14(%arg0: i32, %arg1: memref<8xi32, #tpu.memory_space<smem>>, %arg2: memref<8xi32, #tpu.memory_space<smem>>) -> (i32, i32, i32) {
    %c8_i32 = arith.constant 8 : i32
    %0 = arith.muli %arg0, %c8_i32 : i32
    %c6_i32 = arith.constant 6 : i32
    %1 = arith.addi %0, %c6_i32 : i32
    %2 = arith.index_cast %1 : i32 to index
    %3 = memref.load %arg2[%2] : memref<8xi32, #tpu.memory_space<smem>>
    %c0_i32 = arith.constant 0 : i32
    %c0_i32_0 = arith.constant 0 : i32
    %c0_i32_1 = arith.constant 0 : i32
    return %3, %c0_i32, %c0_i32_0 : i32, i32, i32
  }
  func.func @transform_15(%arg0: i32, %arg1: memref<8xi32, #tpu.memory_space<smem>>, %arg2: memref<8xi32, #tpu.memory_space<smem>>) -> (i32, i32, i32) {
    %c8_i32 = arith.constant 8 : i32
    %0 = arith.muli %arg0, %c8_i32 : i32
    %c7_i32 = arith.constant 7 : i32
    %1 = arith.addi %0, %c7_i32 : i32
    %2 = arith.index_cast %1 : i32 to index
    %3 = memref.load %arg2[%2] : memref<8xi32, #tpu.memory_space<smem>>
    %c0_i32 = arith.constant 0 : i32
    %c0_i32_0 = arith.constant 0 : i32
    %c0_i32_1 = arith.constant 0 : i32
    return %3, %c0_i32, %c0_i32_0 : i32, i32, i32
  }
  func.func @transform_16(%arg0: i32, %arg1: memref<8xi32, #tpu.memory_space<smem>>, %arg2: memref<8xi32, #tpu.memory_space<smem>>) -> (i32, i32) {
    %c0_i32 = arith.constant 0 : i32
    %c0_i32_0 = arith.constant 0 : i32
    return %arg0, %c0_i32 : i32, i32
  }
  func.func @transform_17(%arg0: i32, %arg1: memref<8xi32, #tpu.memory_space<smem>>, %arg2: memref<8xi32, #tpu.memory_space<smem>>) -> (i32, i32) {
    %c0_i32 = arith.constant 0 : i32
    %c0_i32_0 = arith.constant 0 : i32
    return %arg0, %c0_i32 : i32, i32
  }
  func.func @transform_18(%arg0: i32, %arg1: memref<8xi32, #tpu.memory_space<smem>>, %arg2: memref<8xi32, #tpu.memory_space<smem>>) -> (i32, i32) {
    %c0_i32 = arith.constant 0 : i32
    %c0_i32_0 = arith.constant 0 : i32
    return %arg0, %c0_i32 : i32, i32
  }
  func.func @transform_19(%arg0: i32, %arg1: memref<8xi32, #tpu.memory_space<smem>>, %arg2: memref<8xi32, #tpu.memory_space<smem>>) -> (i32, i32) {
    %c0_i32 = arith.constant 0 : i32
    %c0_i32_0 = arith.constant 0 : i32
    return %arg0, %c0_i32 : i32, i32
  }
}

</mosaic_0001>

<llo_original>
// kernel: tpu_custom_call.1
$region0: #{tpu_custom_call.1}
  #allocation0 [shape = 'u32[]', space=smem, size = 0x4, offset = 0x4, fixed_abs, tag = 'smem constant byte address 0x4 - core index']
  #allocation1 [shape = 'u32[144,128]{1,0:T(1,128)}', space=vmem, size = 0x12000, scoped, tag = 'internal scratch']
  #allocation2 [shape = 's32[1]{0}', space=sflag, size = 0x4, scoped, tag = 'scoped memory for tpu_custom_call.1']
  #allocation3 [shape = 'u8[512]{0}', space=smem, size = 0x200, scoped, tag = 'prefetched SMEM operand 0']
  #allocation4 [shape = 'u8[512]{0}', space=smem, size = 0x200, scoped, tag = 'prefetched SMEM operand 1']
  %s0 = inlined_call_operand.hbm [shape: s32[8], index: 0, kind: input, shape index: {}]
  %s1 = inlined_call_operand.vmem [shape: s32[8], index: 1, kind: input, shape index: {}]
  %s2 = inlined_call_operand.hbm [shape: f32[64,1,128], index: 2, kind: input, shape index: {}]
  %s3 = inlined_call_operand.hbm [shape: f32[64,1,128], index: 3, kind: input, shape index: {}]
  %s4 = inlined_call_operand.hbm [shape: f32[64,1,128], index: 4, kind: input, shape index: {}]
  %s5 = inlined_call_operand.hbm [shape: f32[64,1,128], index: 5, kind: input, shape index: {}]
  %s6 = inlined_call_operand.hbm [shape: f32[64,1,128], index: 6, kind: input, shape index: {}]
  %s7 = inlined_call_operand.hbm [shape: f32[64,1,128], index: 7, kind: input, shape index: {}]
  %s8 = inlined_call_operand.hbm [shape: f32[64,1,128], index: 8, kind: input, shape index: {}]
  %s9 = inlined_call_operand.hbm [shape: f32[64,1,128], index: 9, kind: input, shape index: {}]
  %s10 = inlined_call_operand.hbm [shape: f32[96,1,128], index: 10, kind: input, shape index: {}]
  %s11 = inlined_call_operand.hbm [shape: f32[96,1,128], index: 11, kind: input, shape index: {}]
  %s12 = inlined_call_operand.hbm [shape: f32[96,1,128], index: 12, kind: input, shape index: {}]
  %s13 = inlined_call_operand.hbm [shape: f32[96,1,128], index: 13, kind: input, shape index: {}]
  %s14 = inlined_call_operand.hbm [shape: f32[96,1,128], index: 14, kind: input, shape index: {}]
  %s15 = inlined_call_operand.hbm [shape: f32[96,1,128], index: 15, kind: input, shape index: {}]
  %s16 = inlined_call_operand.hbm [shape: f32[96,1,128], index: 16, kind: input, shape index: {}]
  %s17 = inlined_call_operand.hbm [shape: f32[96,1,128], index: 17, kind: input, shape index: {}]
  %s18 = inlined_call_operand.vmem [shape: u32[8,128], index: 18, kind: input, shape index: {}]
  %s19 = inlined_call_operand.vmem [shape: u32[8,128], index: 19, kind: input, shape index: {}]
  %s20 = inlined_call_operand.hbm [shape: f32[8,128], index: 20, kind: output, shape index: {0}]
  %s21 = inlined_call_operand.hbm [shape: f32[8,128], index: 21, kind: output, shape index: {1}]
  %22 = xla_tuple %s20, %s21
  %s23 = sld [smem:[#allocation0]]
  $region154: #{tpu_custom_call.1} parent=0
    _
  %s25 = ssub.s32 1, %s23
  %s26 = scalar_select 0, %s25, %s23
  %28 = dma.hbm_to_smem %s0, 16, [#allocation3], [#allocation2]
  %s29 = sshll.u32 %s1, 4
  %s30 = int_to_ptr.vmem [resolvable:$true] %s29
  %32 = dma.vmem_to_smem %s30, 16, [#allocation4], [#allocation2]
  %33 = dma.done [#allocation2], 32
  %34 = sfence
  $region1: #{tpu_custom_call.1} parent=0
    #allocation5 [shape = 'u8[512]{0}', space=vmem, size = 0x400, scoped, tag = 'input window, operand 2, single buffered']
    #allocation6 [shape = 's32[1]{0}', space=sflag, size = 0x4, scoped, tag = 'scoped memory for tpu_custom_call.1']
    #allocation7 [shape = 's32[1]{0}', space=sflag, size = 0x4, scoped, tag = 'scoped memory for tpu_custom_call.1']
    #allocation8 [shape = 'u8[512]{0}', space=vmem, size = 0x400, scoped, tag = 'input window, operand 3, single buffered']
    #allocation9 [shape = 's32[1]{0}', space=sflag, size = 0x4, scoped, tag = 'scoped memory for tpu_custom_call.1']
    #allocation10 [shape = 'u8[512]{0}', space=vmem, size = 0x400, scoped, tag = 'input window, operand 4, single buffered']
    #allocation11 [shape = 'u8[512]{0}', space=vmem, size = 0x400, scoped, tag = 'input window, operand 5, single buffered']
    #allocation12 [shape = 's32[1]{0}', space=sflag, size = 0x4, scoped, tag = 'scoped memory for tpu_custom_call.1']
    #allocation13 [shape = 'u8[512]{0}', space=vmem, size = 0x400, scoped, tag = 'input window, operand 6, single buffered']
    #allocation14 [shape = 'u8[512]{0}', space=vmem, size = 0x400, scoped, tag = 'input window, operand 7, single buffered']
    #allocation15 [shape = 's32[1]{0}', space=sflag, size = 0x4, scoped, tag = 'scoped memory for tpu_custom_call.1']
    #allocation16 [shape = 'u8[512]{0}', space=vmem, size = 0x400, scoped, tag = 'input window, operand 8, single buffered']
    #allocation17 [shape = 'u8[512]{0}', space=vmem, size = 0x400, scoped, tag = 'input window, operand 9, single buffered']
    #allocation18 [shape = 's32[1]{0}', space=sflag, size = 0x4, scoped, tag = 'scoped memory for tpu_custom_call.1']
    #allocation19 [shape = 'u8[512]{0}', space=vmem, size = 0x400, scoped, tag = 'input window, operand 10, single buffered']
    #allocation20 [shape = 'u8[512]{0}', space=vmem, size = 0x400, scoped, tag = 'input window, operand 11, single buffered']
    #allocation21 [shape = 's32[1]{0}', space=sflag, size = 0x4, scoped, tag = 'scoped memory for tpu_custom_call.1']
    #allocation22 [shape = 'u8[512]{0}', space=vmem, size = 0x400, scoped, tag = 'input window, operand 12, single buffered']
    #allocation23 [shape = 'u8[512]{0}', space=vmem, size = 0x400, scoped, tag = 'input window, operand 13, single buffered']
    #allocation24 [shape = 's32[1]{0}', space=sflag, size = 0x4, scoped, tag = 'scoped memory for tpu_custom_call.1']
    #allocation25 [shape = 'u8[512]{0}', space=vmem, size = 0x400, scoped, tag = 'input window, operand 14, single buffered']
    #allocation26 [shape = 'u8[512]{0}', space=vmem, size = 0x400, scoped, tag = 'input window, operand 15, single buffered']
    #allocation27 [shape = 's32[1]{0}', space=sflag, size = 0x4, scoped, tag = 'scoped memory for tpu_custom_call.1']
    #allocation28 [shape = 'u8[512]{0}', space=vmem, size = 0x400, scoped, tag = 'input window, operand 16, single buffered']
    #allocation29 [shape = 'u8[512]{0}', space=vmem, size = 0x400, scoped, tag = 'input window, operand 17, single buffered']
    #allocation30 [shape = 's32[1]{0}', space=sflag, size = 0x4, scoped, tag = 'scoped memory for tpu_custom_call.1']
    #allocation31 [shape = 'u8[4096]{0}', space=vmem, size = 0x1000, scoped, tag = 'output window, operand 0, single buffered']
    #allocation32 [shape = 'u8[4096]{0}', space=vmem, size = 0x1000, scoped, tag = 'output window, operand 1, single buffered']
    #allocation33 [shape = 's32[1]{0}', space=sflag, size = 0x4, scoped, tag = 'scoped memory for tpu_custom_call.1']
    %35 = vsyncpa [#allocation6], 0
    %36 = vsyncpa [#allocation9], 0
    %37 = vsyncpa [#allocation12], 0
    %38 = vsyncpa [#allocation15], 0
    %39 = vsyncpa [#allocation18], 0
    %40 = vsyncpa [#allocation21], 0
    %41 = vsyncpa [#allocation24], 0
    %42 = vsyncpa [#allocation27], 0
    %43 = vsyncpa [#allocation30], 0
    %44 = vsyncpa [#allocation7], 0
    %45 = vsyncpa [#allocation33], 0
    // Predicated region
    $region2: #{tpu_custom_call.1} parent=1 // pred_check
      _
    $region3: #{tpu_custom_call.1} parent=1 // pred_check_branch
      %47 = sbr.rel (0) target = $region5
    $region4: #{tpu_custom_call.1} parent=1 // pred_region
      %s48 = smul.u32 0, 8
      %s49 = sld [smem:[#allocation3 + %s48]]
      %s51 = ssub.s32 16, 16
      %52 = vsyncadd [#allocation6], %s51
      %s53 = smul.addr %s49, 16
      %s54 = scalar_lea.hbm %s2, %s53
      %s56 = sshll.u32 [#allocation5], 4
      %s57 = int_to_ptr.vmem [resolvable:$true] %s56
      %59 = dma.hbm_to_vmem [thread:$0]  %s54, 16, %s57, [#allocation6]
    $region5: #{tpu_custom_call.1} parent=1 // pred_fallthru
      _
    // Predicated region
    $region6: #{tpu_custom_call.1} parent=1 // pred_check
      _
    $region7: #{tpu_custom_call.1} parent=1 // pred_check_branch
      %61 = sbr.rel (0) target = $region9
    $region8: #{tpu_custom_call.1} parent=1 // pred_region
      %s62 = smul.u32 0, 8
      %s63 = sadd.s32 %s62, 1
      %s64 = sld [smem:[#allocation3 + %s63]]
      %s66 = ssub.s32 16, 16
      %67 = vsyncadd [#allocation9], %s66
      %s68 = smul.addr %s64, 16
      %s69 = scalar_lea.hbm %s3, %s68
      %s71 = sshll.u32 [#allocation8], 4
      %s72 = int_to_ptr.vmem [resolvable:$true] %s71
      %74 = dma.hbm_to_vmem [thread:$0]  %s69, 16, %s72, [#allocation9]
    $region9: #{tpu_custom_call.1} parent=1 // pred_fallthru
      _
    // Predicated region
    $region10: #{tpu_custom_call.1} parent=1 // pred_check
      _
    $region11: #{tpu_custom_call.1} parent=1 // pred_check_branch
      %76 = sbr.rel (0) target = $region13
    $region12: #{tpu_custom_call.1} parent=1 // pred_region
      %s77 = smul.u32 0, 8
      %s78 = sadd.s32 %s77, 2
      %s79 = sld [smem:[#allocation3 + %s78]]
      %s81 = ssub.s32 16, 16
      %82 = vsyncadd [#allocation9], %s81
      %s83 = smul.addr %s79, 16
      %s84 = scalar_lea.hbm %s4, %s83
      %s86 = sshll.u32 [#allocation10], 4
      %s87 = int_to_ptr.vmem [resolvable:$true] %s86
      %89 = dma.hbm_to_vmem [thread:$0]  %s84, 16, %s87, [#allocation9]
    $region13: #{tpu_custom_call.1} parent=1 // pred_fallthru
      _
    // Predicated region
    $region14: #{tpu_custom_call.1} parent=1 // pred_check
      _
    $region15: #{tpu_custom_call.1} parent=1 // pred_check_branch
      %91 = sbr.rel (0) target = $region17
    $region16: #{tpu_custom_call.1} parent=1 // pred_region
      %s92 = smul.u32 0, 8
      %s93 = sadd.s32 %s92, 3
      %s94 = sld [smem:[#allocation3 + %s93]]
      %s96 = ssub.s32 16, 16
      %97 = vsyncadd [#allocation12], %s96
      %s98 = smul.addr %s94, 16
      %s99 = scalar_lea.hbm %s5, %s98
      %s101 = sshll.u32 [#allocation11], 4
      %s102 = int_to_ptr.vmem [resolvable:$true] %s101
      %104 = dma.hbm_to_vmem [thread:$0]  %s99, 16, %s102, [#allocation12]
    $region17: #{tpu_custom_call.1} parent=1 // pred_fallthru
      _
    // Predicated region
    $region18: #{tpu_custom_call.1} parent=1 // pred_check
      _
    $region19: #{tpu_custom_call.1} parent=1 // pred_check_branch
      %106 = sbr.rel (0) target = $region21
    $region20: #{tpu_custom_call.1} parent=1 // pred_region
      %s107 = smul.u32 0, 8
      %s108 = sadd.s32 %s107, 4
      %s109 = sld [smem:[#allocation3 + %s108]]
      %s111 = ssub.s32 16, 16
      %112 = vsyncadd [#allocation12], %s111
      %s113 = smul.addr %s109, 16
      %s114 = scalar_lea.hbm %s6, %s113
      %s116 = sshll.u32 [#allocation13], 4
      %s117 = int_to_ptr.vmem [resolvable:$true] %s116
      %119 = dma.hbm_to_vmem [thread:$0]  %s114, 16, %s117, [#allocation12]
    $region21: #{tpu_custom_call.1} parent=1 // pred_fallthru
      _
    // Predicated region
    $region22: #{tpu_custom_call.1} parent=1 // pred_check
      _
    $region23: #{tpu_custom_call.1} parent=1 // pred_check_branch
      %121 = sbr.rel (0) target = $region25
    $region24: #{tpu_custom_call.1} parent=1 // pred_region
      %s122 = smul.u32 0, 8
      %s123 = sadd.s32 %s122, 5
      %s124 = sld [smem:[#allocation3 + %s123]]
      %s126 = ssub.s32 16, 16
      %127 = vsyncadd [#allocation15], %s126
      %s128 = smul.addr %s124, 16
      %s129 = scalar_lea.hbm %s7, %s128
      %s131 = sshll.u32 [#allocation14], 4
      %s132 = int_to_ptr.vmem [resolvable:$true] %s131
      %134 = dma.hbm_to_vmem [thread:$0]  %s129, 16, %s132, [#allocation15]
    $region25: #{tpu_custom_call.1} parent=1 // pred_fallthru
      _
    // Predicated region
    $region26: #{tpu_custom_call.1} parent=1 // pred_check
      _
    $region27: #{tpu_custom_call.1} parent=1 // pred_check_branch
      %136 = sbr.rel (0) target = $region29
    $region28: #{tpu_custom_call.1} parent=1 // pred_region
      %s137 = smul.u32 0, 8
      %s138 = sadd.s32 %s137, 6
      %s139 = sld [smem:[#allocation3 + %s138]]
      %s141 = ssub.s32 16, 16
      %142 = vsyncadd [#allocation15], %s141
      %s143 = smul.addr %s139, 16
      %s144 = scalar_lea.hbm %s8, %s143
      %s146 = sshll.u32 [#allocation16], 4
      %s147 = int_to_ptr.vmem [resolvable:$true] %s146
      %149 = dma.hbm_to_vmem [thread:$0]  %s144, 16, %s147, [#allocation15]
    $region29: #{tpu_custom_call.1} parent=1 // pred_fallthru
      _
    // Predicated region
    $region30: #{tpu_custom_call.1} parent=1 // pred_check
      _
    $region31: #{tpu_custom_call.1} parent=1 // pred_check_branch
      %151 = sbr.rel (0) target = $region33
    $region32: #{tpu_custom_call.1} parent=1 // pred_region
      %s152 = smul.u32 0, 8
      %s153 = sadd.s32 %s152, 7
      %s154 = sld [smem:[#allocation3 + %s153]]
      %s156 = ssub.s32 16, 16
      %157 = vsyncadd [#allocation18], %s156
      %s158 = smul.addr %s154, 16
      %s159 = scalar_lea.hbm %s9, %s158
      %s161 = sshll.u32 [#allocation17], 4
      %s162 = int_to_ptr.vmem [resolvable:$true] %s161
      %164 = dma.hbm_to_vmem [thread:$0]  %s159, 16, %s162, [#allocation18]
    $region33: #{tpu_custom_call.1} parent=1 // pred_fallthru
      _
    // Predicated region
    $region34: #{tpu_custom_call.1} parent=1 // pred_check
      _
    $region35: #{tpu_custom_call.1} parent=1 // pred_check_branch
      %166 = sbr.rel (0) target = $region37
    $region36: #{tpu_custom_call.1} parent=1 // pred_region
      %s167 = smul.u32 0, 8
      %s168 = sld [smem:[#allocation4 + %s167]]
      %s170 = ssub.s32 16, 16
      %171 = vsyncadd [#allocation18], %s170
      %s172 = smul.addr %s168, 16
      %s173 = scalar_lea.hbm %s10, %s172
      %s175 = sshll.u32 [#allocation19], 4
      %s176 = int_to_ptr.vmem [resolvable:$true] %s175
      %178 = dma.hbm_to_vmem [thread:$0]  %s173, 16, %s176, [#allocation18]
    $region37: #{tpu_custom_call.1} parent=1 // pred_fallthru
      _
    // Predicated region
    $region38: #{tpu_custom_call.1} parent=1 // pred_check
      _
    $region39: #{tpu_custom_call.1} parent=1 // pred_check_branch
      %180 = sbr.rel (0) target = $region41
    $region40: #{tpu_custom_call.1} parent=1 // pred_region
      %s181 = smul.u32 0, 8
      %s182 = sadd.s32 %s181, 1
      %s183 = sld [smem:[#allocation4 + %s182]]
      %s185 = ssub.s32 16, 16
      %186 = vsyncadd [#allocation21], %s185
      %s187 = smul.addr %s183, 16
      %s188 = scalar_lea.hbm %s11, %s187
      %s190 = sshll.u32 [#allocation20], 4
      %s191 = int_to_ptr.vmem [resolvable:$true] %s190
      %193 = dma.hbm_to_vmem [thread:$0]  %s188, 16, %s191, [#allocation21]
    $region41: #{tpu_custom_call.1} parent=1 // pred_fallthru
      _
    // Predicated region
    $region42: #{tpu_custom_call.1} parent=1 // pred_check
      _
    $region43: #{tpu_custom_call.1} parent=1 // pred_check_branch
      %195 = sbr.rel (0) target = $region45
    $region44: #{tpu_custom_call.1} parent=1 // pred_region
      %s196 = smul.u32 0, 8
      %s197 = sadd.s32 %s196, 2
      %s198 = sld [smem:[#allocation4 + %s197]]
      %s200 = ssub.s32 16, 16
      %201 = vsyncadd [#allocation21], %s200
      %s202 = smul.addr %s198, 16
      %s203 = scalar_lea.hbm %s12, %s202
      %s205 = sshll.u32 [#allocation22], 4
      %s206 = int_to_ptr.vmem [resolvable:$true] %s205
      %208 = dma.hbm_to_vmem [thread:$0]  %s203, 16, %s206, [#allocation21]
    $region45: #{tpu_custom_call.1} parent=1 // pred_fallthru
      _
    // Predicated region
    $region46: #{tpu_custom_call.1} parent=1 // pred_check
      _
    $region47: #{tpu_custom_call.1} parent=1 // pred_check_branch
      %210 = sbr.rel (0) target = $region49
    $region48: #{tpu_custom_call.1} parent=1 // pred_region
      %s211 = smul.u32 0, 8
      %s212 = sadd.s32 %s211, 3
      %s213 = sld [smem:[#allocation4 + %s212]]
      %s215 = ssub.s32 16, 16
      %216 = vsyncadd [#allocation24], %s215
      %s217 = smul.addr %s213, 16
      %s218 = scalar_lea.hbm %s13, %s217
      %s220 = sshll.u32 [#allocation23], 4
      %s221 = int_to_ptr.vmem [resolvable:$true] %s220
      %223 = dma.hbm_to_vmem [thread:$0]  %s218, 16, %s221, [#allocation24]
    $region49: #{tpu_custom_call.1} parent=1 // pred_fallthru
      _
    // Predicated region
    $region50: #{tpu_custom_call.1} parent=1 // pred_check
      _
    $region51: #{tpu_custom_call.1} parent=1 // pred_check_branch
      %225 = sbr.rel (0) target = $region53
    $region52: #{tpu_custom_call.1} parent=1 // pred_region
      %s226 = smul.u32 0, 8
      %s227 = sadd.s32 %s226, 4
      %s228 = sld [smem:[#allocation4 + %s227]]
      %s230 = ssub.s32 16, 16
      %231 = vsyncadd [#allocation24], %s230
      %s232 = smul.addr %s228, 16
      %s233 = scalar_lea.hbm %s14, %s232
      %s235 = sshll.u32 [#allocation25], 4
      %s236 = int_to_ptr.vmem [resolvable:$true] %s235
      %238 = dma.hbm_to_vmem [thread:$0]  %s233, 16, %s236, [#allocation24]
    $region53: #{tpu_custom_call.1} parent=1 // pred_fallthru
      _
    // Predicated region
    $region54: #{tpu_custom_call.1} parent=1 // pred_check
      _
    $region55: #{tpu_custom_call.1} parent=1 // pred_check_branch
      %240 = sbr.rel (0) target = $region57
    $region56: #{tpu_custom_call.1} parent=1 // pred_region
      %s241 = smul.u32 0, 8
      %s242 = sadd.s32 %s241, 5
      %s243 = sld [smem:[#allocation4 + %s242]]
      %s245 = ssub.s32 16, 16
      %246 = vsyncadd [#allocation27], %s245
      %s247 = smul.addr %s243, 16
      %s248 = scalar_lea.hbm %s15, %s247
      %s250 = sshll.u32 [#allocation26], 4
      %s251 = int_to_ptr.vmem [resolvable:$true] %s250
      %253 = dma.hbm_to_vmem [thread:$0]  %s248, 16, %s251, [#allocation27]
    $region57: #{tpu_custom_call.1} parent=1 // pred_fallthru
      _
    // Predicated region
    $region58: #{tpu_custom_call.1} parent=1 // pred_check
      _
    $region59: #{tpu_custom_call.1} parent=1 // pred_check_branch
      %255 = sbr.rel (0) target = $region61
    $region60: #{tpu_custom_call.1} parent=1 // pred_region
      %s256 = smul.u32 0, 8
      %s257 = sadd.s32 %s256, 6
      %s258 = sld [smem:[#allocation4 + %s257]]
      %s260 = ssub.s32 16, 16
      %261 = vsyncadd [#allocation27], %s260
      %s262 = smul.addr %s258, 16
      %s263 = scalar_lea.hbm %s16, %s262
      %s265 = sshll.u32 [#allocation28], 4
      %s266 = int_to_ptr.vmem [resolvable:$true] %s265
      %268 = dma.hbm_to_vmem [thread:$0]  %s263, 16, %s266, [#allocation27]
    $region61: #{tpu_custom_call.1} parent=1 // pred_fallthru
      _
    // Predicated region
    $region62: #{tpu_custom_call.1} parent=1 // pred_check
      _
    $region63: #{tpu_custom_call.1} parent=1 // pred_check_branch
      %270 = sbr.rel (0) target = $region65
    $region64: #{tpu_custom_call.1} parent=1 // pred_region
      %s271 = smul.u32 0, 8
      %s272 = sadd.s32 %s271, 7
      %s273 = sld [smem:[#allocation4 + %s272]]
      %s275 = ssub.s32 16, 16
      %276 = vsyncadd [#allocation30], %s275
      %s277 = smul.addr %s273, 16
      %s278 = scalar_lea.hbm %s17, %s277
      %s280 = sshll.u32 [#allocation29], 4
      %s281 = int_to_ptr.vmem [resolvable:$true] %s280
      %283 = dma.hbm_to_vmem [thread:$0]  %s278, 16, %s281, [#allocation30]
    $region65: #{tpu_custom_call.1} parent=1 // pred_fallthru
      _
    // Predicated region
    $region66: #{tpu_custom_call.1} parent=1 // pred_check
      _
    $region67: #{tpu_custom_call.1} parent=1 // pred_check_branch
      %285 = sbr.rel (0) target = $region69
    $region68: #{tpu_custom_call.1} parent=1 // pred_region
      _
    $region69: #{tpu_custom_call.1} parent=1 // pred_fallthru
      _
    // Predicated region
    $region70: #{tpu_custom_call.1} parent=1 // pred_check
      _
    $region71: #{tpu_custom_call.1} parent=1 // pred_check_branch
      %287 = sbr.rel (0) target = $region73
    $region72: #{tpu_custom_call.1} parent=1 // pred_region
      _
    $region73: #{tpu_custom_call.1} parent=1 // pred_fallthru
      _
    // Predicated region
    $region74: #{tpu_custom_call.1} parent=1 // pred_check
      _
    $region75: #{tpu_custom_call.1} parent=1 // pred_check_branch
      %289 = sbr.rel (0) target = $region77
    $region76: #{tpu_custom_call.1} parent=1 // pred_region
      %290 = dma.done [#allocation6], 16
    $region77: #{tpu_custom_call.1} parent=1 // pred_fallthru
      _
    // Predicated region
    $region78: #{tpu_custom_call.1} parent=1 // pred_check
      _
    $region79: #{tpu_custom_call.1} parent=1 // pred_check_branch
      %292 = sbr.rel (0) target = $region81
    $region80: #{tpu_custom_call.1} parent=1 // pred_region
      %293 = dma.done [#allocation9], 16
    $region81: #{tpu_custom_call.1} parent=1 // pred_fallthru
      _
    // Predicated region
    $region82: #{tpu_custom_call.1} parent=1 // pred_check
      _
    $region83: #{tpu_custom_call.1} parent=1 // pred_check_branch
      %295 = sbr.rel (0) target = $region85
    $region84: #{tpu_custom_call.1} parent=1 // pred_region
      %296 = dma.done [#allocation9], 16
    $region85: #{tpu_custom_call.1} parent=1 // pred_fallthru
      _
    // Predicated region
    $region86: #{tpu_custom_call.1} parent=1 // pred_check
      _
    $region87: #{tpu_custom_call.1} parent=1 // pred_check_branch
      %298 = sbr.rel (0) target = $region89
    $region88: #{tpu_custom_call.1} parent=1 // pred_region
      %299 = dma.done [#allocation12], 16
    $region89: #{tpu_custom_call.1} parent=1 // pred_fallthru
      _
    // Predicated region
    $region90: #{tpu_custom_call.1} parent=1 // pred_check
      _
    $region91: #{tpu_custom_call.1} parent=1 // pred_check_branch
      %301 = sbr.rel (0) target = $region93
    $region92: #{tpu_custom_call.1} parent=1 // pred_region
      %302 = dma.done [#allocation12], 16
    $region93: #{tpu_custom_call.1} parent=1 // pred_fallthru
      _
    // Predicated region
    $region94: #{tpu_custom_call.1} parent=1 // pred_check
      _
    $region95: #{tpu_custom_call.1} parent=1 // pred_check_branch
      %304 = sbr.rel (0) target = $region97
    $region96: #{tpu_custom_call.1} parent=1 // pred_region
      %305 = dma.done [#allocation15], 16
    $region97: #{tpu_custom_call.1} parent=1 // pred_fallthru
      _
    // Predicated region
    $region98: #{tpu_custom_call.1} parent=1 // pred_check
      _
    $region99: #{tpu_custom_call.1} parent=1 // pred_check_branch
      %307 = sbr.rel (0) target = $region101
    $region100: #{tpu_custom_call.1} parent=1 // pred_region
      %308 = dma.done [#allocation15], 16
    $region101: #{tpu_custom_call.1} parent=1 // pred_fallthru
      _
    // Predicated region
    $region102: #{tpu_custom_call.1} parent=1 // pred_check
      _
    $region103: #{tpu_custom_call.1} parent=1 // pred_check_branch
      %310 = sbr.rel (0) target = $region105
    $region104: #{tpu_custom_call.1} parent=1 // pred_region
      %311 = dma.done [#allocation18], 16
    $region105: #{tpu_custom_call.1} parent=1 // pred_fallthru
      _
    // Predicated region
    $region106: #{tpu_custom_call.1} parent=1 // pred_check
      _
    $region107: #{tpu_custom_call.1} parent=1 // pred_check_branch
      %313 = sbr.rel (0) target = $region109
    $region108: #{tpu_custom_call.1} parent=1 // pred_region
      %314 = dma.done [#allocation18], 16
    $region109: #{tpu_custom_call.1} parent=1 // pred_fallthru
      _
    // Predicated region
    $region110: #{tpu_custom_call.1} parent=1 // pred_check
      _
    $region111: #{tpu_custom_call.1} parent=1 // pred_check_branch
      %316 = sbr.rel (0) target = $region113
    $region112: #{tpu_custom_call.1} parent=1 // pred_region
      %317 = dma.done [#allocation21], 16
    $region113: #{tpu_custom_call.1} parent=1 // pred_fallthru
      _
    // Predicated region
    $region114: #{tpu_custom_call.1} parent=1 // pred_check
      _
    $region115: #{tpu_custom_call.1} parent=1 // pred_check_branch
      %319 = sbr.rel (0) target = $region117
    $region116: #{tpu_custom_call.1} parent=1 // pred_region
      %320 = dma.done [#allocation21], 16
    $region117: #{tpu_custom_call.1} parent=1 // pred_fallthru
      _
    // Predicated region
    $region118: #{tpu_custom_call.1} parent=1 // pred_check
      _
    $region119: #{tpu_custom_call.1} parent=1 // pred_check_branch
      %322 = sbr.rel (0) target = $region121
    $region120: #{tpu_custom_call.1} parent=1 // pred_region
      %323 = dma.done [#allocation24], 16
    $region121: #{tpu_custom_call.1} parent=1 // pred_fallthru
      _
    // Predicated region
    $region122: #{tpu_custom_call.1} parent=1 // pred_check
      _
    $region123: #{tpu_custom_call.1} parent=1 // pred_check_branch
      %325 = sbr.rel (0) target = $region125
    $region124: #{tpu_custom_call.1} parent=1 // pred_region
      %326 = dma.done [#allocation24], 16
    $region125: #{tpu_custom_call.1} parent=1 // pred_fallthru
      _
    // Predicated region
    $region126: #{tpu_custom_call.1} parent=1 // pred_check
      _
    $region127: #{tpu_custom_call.1} parent=1 // pred_check_branch
      %328 = sbr.rel (0) target = $region129
    $region128: #{tpu_custom_call.1} parent=1 // pred_region
      %329 = dma.done [#allocation27], 16
    $region129: #{tpu_custom_call.1} parent=1 // pred_fallthru
      _
    // Predicated region
    $region130: #{tpu_custom_call.1} parent=1 // pred_check
      _
    $region131: #{tpu_custom_call.1} parent=1 // pred_check_branch
      %331 = sbr.rel (0) target = $region133
    $region132: #{tpu_custom_call.1} parent=1 // pred_region
      %332 = dma.done [#allocation27], 16
    $region133: #{tpu_custom_call.1} parent=1 // pred_fallthru
      _
    // Predicated region
    $region134: #{tpu_custom_call.1} parent=1 // pred_check
      _
    $region135: #{tpu_custom_call.1} parent=1 // pred_check_branch
      %334 = sbr.rel (0) target = $region137
    $region136: #{tpu_custom_call.1} parent=1 // pred_region
      %335 = dma.done [#allocation30], 16
    $region137: #{tpu_custom_call.1} parent=1 // pred_fallthru
      _
    %s336 = smul.u32 0, 8
    %s337 = sld [smem:[#allocation3 + %s336]]
    %s338 = smul.u32 0, 8
    %s339 = sadd.s32 %s338, 1
    %s340 = sld [smem:[#allocation3 + %s339]]
    %s341 = smul.u32 0, 8
    %s342 = sadd.s32 %s341, 2
    %s343 = sld [smem:[#allocation3 + %s342]]
    %s344 = smul.u32 0, 8
    %s345 = sadd.s32 %s344, 3
    %s346 = sld [smem:[#allocation3 + %s345]]
    %s347 = smul.u32 0, 8
    %s348 = sadd.s32 %s347, 4
    %s349 = sld [smem:[#allocation3 + %s348]]
    %s350 = smul.u32 0, 8
    %s351 = sadd.s32 %s350, 5
    %s352 = sld [smem:[#allocation3 + %s351]]
    %s353 = smul.u32 0, 8
    %s354 = sadd.s32 %s353, 6
    %s355 = sld [smem:[#allocation3 + %s354]]
    %s356 = smul.u32 0, 8
    %s357 = sadd.s32 %s356, 7
    %s358 = sld [smem:[#allocation3 + %s357]]
    %s359 = smul.u32 0, 8
    %s360 = sld [smem:[#allocation4 + %s359]]
    %s361 = smul.u32 0, 8
    %s362 = sadd.s32 %s361, 1
    %s363 = sld [smem:[#allocation4 + %s362]]
    %s364 = smul.u32 0, 8
    %s365 = sadd.s32 %s364, 2
    %s366 = sld [smem:[#allocation4 + %s365]]
    %s367 = smul.u32 0, 8
    %s368 = sadd.s32 %s367, 3
    %s369 = sld [smem:[#allocation4 + %s368]]
    %s370 = smul.u32 0, 8
    %s371 = sadd.s32 %s370, 4
    %s372 = sld [smem:[#allocation4 + %s371]]
    %s373 = smul.u32 0, 8
    %s374 = sadd.s32 %s373, 5
    %s375 = sld [smem:[#allocation4 + %s374]]
    %s376 = smul.u32 0, 8
    %s377 = sadd.s32 %s376, 6
    %s378 = sld [smem:[#allocation4 + %s377]]
    %s379 = smul.u32 0, 8
    %s380 = sadd.s32 %s379, 7
    %s381 = sld [smem:[#allocation4 + %s380]]
    %v382 = vld [vmem:[#allocation5] sm:$0x1]
    %v383 = vld [vmem:[#allocation8] sm:$0x1]
    %v384 = vld [vmem:[#allocation10] sm:$0x1]
    %v385 = vld [vmem:[#allocation11] sm:$0x1]
    %v386 = vld [vmem:[#allocation13] sm:$0x1]
    %v387 = vld [vmem:[#allocation14] sm:$0x1]
    %v388 = vld [vmem:[#allocation16] sm:$0x1]
    %v389 = vld [vmem:[#allocation17] sm:$0x1]
    %v391 = vlaneseq
    %v392 = vshrl.u32 %v391, 7
    %v393 = vsub.s32 0, %v392
    %v394 = vrot.slane %v383, %v393
    %v397 = vlaneseq
    %v398 = vshrl.u32 %v397, 7
    %v399 = vsub.s32 0, %v398
    %v400 = vrot.slane %v384, %v399
    %v403 = vlaneseq
    %v404 = vshrl.u32 %v403, 7
    %v405 = vsub.s32 0, %v404
    %v406 = vrot.slane %v385, %v405
    %v409 = vlaneseq
    %v410 = vshrl.u32 %v409, 7
    %v411 = vsub.s32 0, %v410
    %v412 = vrot.slane %v386, %v411
    %v415 = vlaneseq
    %v416 = vshrl.u32 %v415, 7
    %v417 = vsub.s32 0, %v416
    %v418 = vrot.slane %v387, %v417
    %v421 = vlaneseq
    %v422 = vshrl.u32 %v421, 7
    %v423 = vsub.s32 0, %v422
    %v424 = vrot.slane %v388, %v423
    %v427 = vlaneseq
    %v428 = vshrl.u32 %v427, 7
    %v429 = vsub.s32 0, %v428
    %v430 = vrot.slane %v389, %v429
    %vm432 = vcmask 1040384
    %v433 = vsel %vm432, %v382, %v394
    %vm434 = vcmask 1041408
    %v435 = vsel %vm434, %v433, %v400
    %vm436 = vcmask 1042432
    %v437 = vsel %vm436, %v435, %v406
    %vm438 = vcmask 1043456
    %v439 = vsel %vm438, %v437, %v412
    %vm440 = vcmask 1044480
    %v441 = vsel %vm440, %v439, %v418
    %vm442 = vcmask 1045504
    %v443 = vsel %vm442, %v441, %v424
    %vm444 = vcmask 1046528
    %v445 = vsel %vm444, %v443, %v430
    %v446 = vld [vmem:[#allocation19] sm:$0x1]
    %v447 = vld [vmem:[#allocation20] sm:$0x1]
    %v448 = vld [vmem:[#allocation22] sm:$0x1]
    %v449 = vld [vmem:[#allocation23] sm:$0x1]
    %v450 = vld [vmem:[#allocation25] sm:$0x1]
    %v451 = vld [vmem:[#allocation26] sm:$0x1]
    %v452 = vld [vmem:[#allocation28] sm:$0x1]
    %v453 = vld [vmem:[#allocation29] sm:$0x1]
    %v455 = vlaneseq
    %v456 = vshrl.u32 %v455, 7
    %v457 = vsub.s32 0, %v456
    %v458 = vrot.slane %v447, %v457
    %v461 = vlaneseq
    %v462 = vshrl.u32 %v461, 7
    %v463 = vsub.s32 0, %v462
    %v464 = vrot.slane %v448, %v463
    %v467 = vlaneseq
    %v468 = vshrl.u32 %v467, 7
    %v469 = vsub.s32 0, %v468
    %v470 = vrot.slane %v449, %v469
    %v473 = vlaneseq
    %v474 = vshrl.u32 %v473, 7
    %v475 = vsub.s32 0, %v474
    %v476 = vrot.slane %v450, %v475
    %v479 = vlaneseq
    %v480 = vshrl.u32 %v479, 7
    %v481 = vsub.s32 0, %v480
    %v482 = vrot.slane %v451, %v481
    %v485 = vlaneseq
    %v486 = vshrl.u32 %v485, 7
    %v487 = vsub.s32 0, %v486
    %v488 = vrot.slane %v452, %v487
    %v491 = vlaneseq
    %v492 = vshrl.u32 %v491, 7
    %v493 = vsub.s32 0, %v492
    %v494 = vrot.slane %v453, %v493
    %v496 = vsel %vm432, %v446, %v458
    %v497 = vsel %vm434, %v496, %v464
    %v498 = vsel %vm436, %v497, %v470
    %v499 = vsel %vm438, %v498, %v476
    %v500 = vsel %vm440, %v499, %v482
    %v501 = vsel %vm442, %v500, %v488
    %v502 = vsel %vm444, %v501, %v494
    %v503 = vld [vmem:[%s18] sm:$0xff]
    %vm504 = vcmp.ge.u32.totalorder %v503, 858993459
    %v505 = vmul.f32 %v445, 1.25
    %v506 = vsel %vm504, %v505, 0.0
    %507 = vst [vmem:[#allocation31] sm:$0xff] %v506
    %v508 = vld [vmem:[%s19] sm:$0xff]
    %vm509 = vcmp.ge.u32.totalorder %v508, 858993459
    %v510 = vmul.f32 %v502, 1.25
    %v511 = vsel %vm509, %v510, 0.0
    %512 = vst [vmem:[#allocation32] sm:$0xff] %v511
    // Predicated region
    $region138: #{tpu_custom_call.1} parent=1 // pred_check
      _
    $region139: #{tpu_custom_call.1} parent=1 // pred_check_branch
      %514 = sbr.rel (0) target = $region141
    $region140: #{tpu_custom_call.1} parent=1 // pred_region
      %s516 = ssub.s32 128, 128
      %517 = vsyncadd [#allocation7], %s516
      %s519 = sshll.u32 [#allocation31], 4
      %s520 = int_to_ptr.vmem [resolvable:$true] %s519
      %522 = dma.vmem_to_hbm [thread:$0]  %s520, 128, %s20, [#allocation7]
    $region141: #{tpu_custom_call.1} parent=1 // pred_fallthru
      _
    // Predicated region
    $region142: #{tpu_custom_call.1} parent=1 // pred_check
      _
    $region143: #{tpu_custom_call.1} parent=1 // pred_check_branch
      %524 = sbr.rel (0) target = $region145
    $region144: #{tpu_custom_call.1} parent=1 // pred_region
      %s526 = ssub.s32 128, 128
      %527 = vsyncadd [#allocation33], %s526
      %s529 = sshll.u32 [#allocation32], 4
      %s530 = int_to_ptr.vmem [resolvable:$true] %s529
      %532 = dma.vmem_to_hbm [thread:$0]  %s530, 128, %s21, [#allocation33]
    $region145: #{tpu_custom_call.1} parent=1 // pred_fallthru
      _
    // Predicated region
    $region146: #{tpu_custom_call.1} parent=1 // pred_check
      _
    $region147: #{tpu_custom_call.1} parent=1 // pred_check_branch
      %534 = sbr.rel (0) target = $region149
    $region148: #{tpu_custom_call.1} parent=1 // pred_region
      %535 = dma.done [#allocation7], 128
    $region149: #{tpu_custom_call.1} parent=1 // pred_fallthru
      _
    // Predicated region
    $region150: #{tpu_custom_call.1} parent=1 // pred_check
      _
    $region151: #{tpu_custom_call.1} parent=1 // pred_check_branch
      %537 = sbr.rel (0) target = $region153
    $region152: #{tpu_custom_call.1} parent=1 // pred_region
      %538 = dma.done [#allocation33], 128
    $region153: #{tpu_custom_call.1} parent=1 // pred_fallthru
      _
    %539 = vsyncpa [#allocation6], 1
    %540 = vsyncpa [#allocation9], 1
    %541 = vsyncpa [#allocation12], 1
    %542 = vsyncpa [#allocation15], 1
    %543 = vsyncpa [#allocation18], 1
    %544 = vsyncpa [#allocation21], 1
    %545 = vsyncpa [#allocation24], 1
    %546 = vsyncpa [#allocation27], 1
    %547 = vsyncpa [#allocation30], 1
    %548 = vsyncpa [#allocation7], 1
    %549 = vsyncpa [#allocation33], 1

</llo_original>
